<compile_context>
chip_gen: v7x
topology: tpu7x:2x2x1
jax: 0.10.0
libtpu: 0.0.40
codegen_flags: <defaults>
</compile_context>

<pallas_src>
import functools

import jax
import jax.numpy as jnp
from jax.experimental import pallas as pl
from jax.experimental.pallas import tpu as pltpu

LANES = 128
TARGET_BLOCK_BYTES = 4 * 1024 * 1024   # per input buffer (x2 for double buffering)
VMEM_LIMIT_BYTES = 48 * 1024 * 1024    # safely below 64 MiB physical on all gens


def _cdiv(a: int, b: int) -> int:
    return -(-a // b)


def _entropic_kernel(x_ref, o_ref, m_acc, s_acc, *,
                     a, n_rows, n_total, block_rows, nb, needs_mask):
    """grid = (nb,) row-blocks streamed through VMEM.

    m_acc : (1,128) f32 VMEM scratch — running per-lane min of the data seen so far.
    s_acc : (1,128) f32 VMEM scratch — running per-lane sum of exp(-a*(x - m)).
    o_ref : (1,1)  f32 output, written once on the last grid step.
    """
    j = pl.program_id(0)

    def scale(d):
        # VPU has no f32 FMA: statically elide the multiply for the default a == 1.
        return d if a == 1.0 else a * d

    @pl.when(j == 0)
    def _init():
        m_acc[...] = jnp.full((1, LANES), jnp.inf, dtype=jnp.float32)
        s_acc[...] = jnp.zeros((1, LANES), dtype=jnp.float32)

    x = x_ref[...].astype(jnp.float32)   # DMA native dtype, widen on-chip

    def accumulate(xv):
        m_old = m_acc[...]
        m_new = jnp.minimum(m_old, jnp.min(xv, axis=0, keepdims=True))
        # Flash-style rescale of the accumulated sum to the new running min:
        #   exp(-a*(x - m_new)) = exp(-a*(x - m_old)) * exp(a*(m_new - m_old))
        rescale = jnp.exp(scale(m_new - m_old))        # == 0 on the first block
        contrib = jnp.exp(scale(m_new - xv))           # == exp(-a*(xv - m_new)) in (0,1]
        s_acc[...] = s_acc[...] * rescale + jnp.sum(contrib, axis=0, keepdims=True)
        m_acc[...] = m_new

    if needs_mask:
        # Only the single over-covering tail block pays iota + cmp + select;
        # interior blocks stay on the lean (HBM-bound) path.
        @pl.when(j < nb - 1)
        def _interior():
            accumulate(x)

        @pl.when(j == nb - 1)
        def _tail():
            row0 = (nb - 1) * block_rows
            rid = row0 + jax.lax.broadcasted_iota(jnp.int32, x.shape, 0)
            # Out-of-range rows -> +inf: ignored by min(), exp(-inf) == 0 for sum.
            accumulate(jnp.where(rid < n_rows, x, jnp.inf))
    else:
        accumulate(x)

    @pl.when(j == nb - 1)
    def _finalize():
        m = m_acc[...]
        s = s_acc[...]
        m_g = jnp.min(m, axis=1, keepdims=True)        # global min == input.min()
        # Lanes that never saw valid data (only possible when n_total < 128) keep
        # m == +inf and may hold NaN sums; drop them, re-reference the rest to the
        # global min.
        valid = m < jnp.inf
        s_adj = jnp.where(valid, s * jnp.exp(scale(m_g - m)), 0.0)
        mean_log = jnp.log(jnp.sum(s_adj, axis=1, keepdims=True) / n_total)
        o_ref[...] = (mean_log - m_g) if a == 1.0 else (mean_log / a - m_g)


@functools.partial(jax.jit, static_argnames=("a",))
def entropic_risk_measure(input_T: jax.Array, a: float = 1.0) -> jax.Array:
    """Pallas TPU implementation of EntropicRiskMeasure.forward."""
    if not a > 0:
        raise ValueError("Risk aversion coefficient should be positive.")
    a = float(a)

    x = input_T
    if x.dtype not in (jnp.float32, jnp.bfloat16, jnp.float16):
        x = x.astype(jnp.float32)
    n_total = x.size
    flat = x.reshape(-1)   # metadata-only reshape

    # Lane padding with +inf only if the element count is not a multiple of 128.
    rem = n_total % LANES
    if rem:
        # TODO(synk): the ragged-tail case still pays one padded copy; a
        # zero-copy prefix + tiny tail pass could remove it for huge inputs.
        flat = jnp.pad(flat, (0, LANES - rem), constant_values=jnp.inf)
    n_rows = flat.shape[0] // LANES
    x2d = flat.reshape(n_rows, LANES)   # zero-copy in the aligned (common) case

    itemsize = x2d.dtype.itemsize
    pack = max(8, 32 // itemsize)                       # sublane packing per dtype
    target_rows = TARGET_BLOCK_BYTES // (LANES * itemsize)
    target_rows = max(pack, (target_rows // pack) * pack)

    if n_rows <= target_rows:
        block_rows = n_rows        # single block == full array dim (always legal)
    else:
        block_rows = target_rows   # multiple of the sublane packing
    nb = _cdiv(n_rows, block_rows)
    needs_mask = (nb * block_rows) != n_rows            # static

    kernel = functools.partial(
        _entropic_kernel,
        a=a, n_rows=n_rows, n_total=n_total,
        block_rows=block_rows, nb=nb, needs_mask=needs_mask,
    )

    out = pl.pallas_call(
        kernel,
        out_shape=jax.ShapeDtypeStruct((1, 1), jnp.float32),
        grid_spec=pltpu.PrefetchScalarGridSpec(
            num_scalar_prefetch=0,
            grid=(nb,),
            in_specs=[pl.BlockSpec((block_rows, LANES), lambda j: (j, 0))],
            out_specs=pl.BlockSpec((1, 1), lambda j: (0, 0)),
            scratch_shapes=[
                pltpu.VMEM((1, LANES), jnp.float32),    # running per-lane min
                pltpu.VMEM((1, LANES), jnp.float32),    # running per-lane exp-sum
            ],
        ),
        compiler_params=pltpu.CompilerParams(
            dimension_semantics=("arbitrary",),
            vmem_limit_bytes=VMEM_LIMIT_BYTES,
        ),
    )(x2d)
    return out[0, 0]


def entropic_risk_measure_ref(input_T: jax.Array, a: float = 1.0) -> jax.Array:
    """Pure-JAX reference mirroring the PyTorch module exactly."""
    x = input_T.astype(jnp.float32)
    x_min = jnp.min(x)
    return jnp.log(jnp.mean(jnp.exp(-a * (x - x_min)))) / a - x_min


if __name__ == "__main__":
    key = jax.random.PRNGKey(0)
    k1, k2, k3, k4 = jax.random.split(key, 4)

    # (n_paths, 1) terminal wealth, ragged size -> lane pad, single full-dim block.
    x_small = jax.random.normal(k1, (3000, 1), dtype=jnp.float32) * 0.5 + 1.0
    out = jax.block_until_ready(entropic_risk_measure(x_small, a=1.0))
    ref = entropic_risk_measure_ref(x_small, a=1.0)
    assert jnp.allclose(out, ref, rtol=1e-5, atol=1e-5), (out, ref)

    # Lane-aligned, multi-block streaming with a partial (masked) tail block.
    x_big = jax.random.normal(k2, (1024, 1200), dtype=jnp.float32) * 2.0
    out = jax.block_until_ready(entropic_risk_measure(x_big, a=2.0))
    ref = entropic_risk_measure_ref(x_big, a=2.0)
    assert jnp.allclose(out, ref, rtol=1e-4, atol=1e-4), (out, ref)

    # Native narrow dtype: the kernel DMAs bf16 and widens to f32 on-chip.
    x_bf16 = (jax.random.normal(k3, (2048, 1), dtype=jnp.float32) * 0.3 + 0.5
              ).astype(jnp.bfloat16)
    out = jax.block_until_ready(entropic_risk_measure(x_bf16, a=1.0))
    ref = entropic_risk_measure_ref(x_bf16, a=1.0)
    assert jnp.allclose(out, ref, rtol=1e-4, atol=1e-4), (out, ref)

    # Tiny input (< 128 elements) -> exercises the never-valid-lane handling.
    x_tiny = jax.random.normal(k4, (50, 1), dtype=jnp.float32) * 0.2 - 0.3
    out = jax.block_until_ready(entropic_risk_measure(x_tiny, a=1.5))
    ref = entropic_risk_measure_ref(x_tiny, a=1.5)
    assert jnp.allclose(out, ref, rtol=1e-5, atol=1e-5), (out, ref)

    print("KERNEL_OK")
</pallas_src>

<mosaic_0001>
module attributes {stable_mosaic.version = 11 : i64} {
  func.func @_entropic_kernel(%arg0: i32, %arg1: memref<24x128xf32, #tpu.memory_space<vmem>>, %arg2: memref<1x1xf32, #tpu.memory_space<vmem>>, %arg3: memref<1x128xf32, #tpu.memory_space<vmem>>, %arg4: memref<1x128xf32, #tpu.memory_space<vmem>>) attributes {dimension_semantics = [#tpu.dimension_semantics<arbitrary>], iteration_bounds = array<i64: 1>, scalar_prefetch = 0 : i64, scratch_operands = 2 : i64, tpu.core_type = #tpu.core_type<tc>, window_params = [{transform_indices = @transform_0, window_bounds = array<i64: 24, 128>}, {pipeline_mode = #tpu.pipeline_mode<synchronous>, transform_indices = @transform_1, window_bounds = array<i64: 1, 1>}]} {
    %c0_i32 = arith.constant 0 : i32
    %0 = arith.cmpi eq, %arg0, %c0_i32 : i32
    %1 = arith.extui %0 : i1 to i32
    %c0_i32_0 = arith.constant 0 : i32
    %2 = arith.cmpi ne, %1, %c0_i32_0 : i32
    scf.if %2 {
      %cst_13 = arith.constant 0x7F800000 : f32
      %23 = vector.broadcast %cst_13 : f32 to vector<1x128xf32>
      %c0_14 = arith.constant 0 : index
      %c0_15 = arith.constant 0 : index
      %24 = vector.load %arg3[%c0_14, %c0_15] : memref<1x128xf32, #tpu.memory_space<vmem>>, vector<1x128xf32>
      tpu.vector_store %arg3[%c0_14, %c0_15], %23 {strides = array<i32>} : memref<1x128xf32, #tpu.memory_space<vmem>>, vector<1x128xf32>,
      %cst_16 = arith.constant 0.000000e+00 : f32
      %25 = vector.broadcast %cst_16 : f32 to vector<1x128xf32>
      %c0_17 = arith.constant 0 : index
      %c0_18 = arith.constant 0 : index
      %26 = vector.load %arg4[%c0_17, %c0_18] : memref<1x128xf32, #tpu.memory_space<vmem>>, vector<1x128xf32>
      tpu.vector_store %arg4[%c0_17, %c0_18], %25 {strides = array<i32>} : memref<1x128xf32, #tpu.memory_space<vmem>>, vector<1x128xf32>,
    } else {
    }
    %c0 = arith.constant 0 : index
    %c0_1 = arith.constant 0 : index
    %3 = vector.load %arg1[%c0, %c0_1] : memref<24x128xf32, #tpu.memory_space<vmem>>, vector<24x128xf32>
    %c0_2 = arith.constant 0 : index
    %c0_3 = arith.constant 0 : index
    %4 = vector.load %arg3[%c0_2, %c0_3] : memref<1x128xf32, #tpu.memory_space<vmem>>, vector<1x128xf32>
    %cst = arith.constant dense<0x7F800000> : vector<128xf32>
    %5 = vector.multi_reduction <minimumf>, %3, %cst [0] : vector<24x128xf32> to vector<128xf32>
    %6 = vector.shape_cast %5 : vector<128xf32> to vector<1x128xf32>
    %7 = arith.minimumf %4, %6 : vector<1x128xf32>
    %8 = arith.subf %7, %4 : vector<1x128xf32>
    %9 = math.exp %8 : vector<1x128xf32>
    %10 = vector.broadcast %7 : vector<1x128xf32> to vector<24x128xf32>
    %11 = arith.subf %10, %3 : vector<24x128xf32>
    %12 = math.exp %11 : vector<24x128xf32>
    %c0_4 = arith.constant 0 : index
    %c0_5 = arith.constant 0 : index
    %13 = vector.load %arg4[%c0_4, %c0_5] : memref<1x128xf32, #tpu.memory_space<vmem>>, vector<1x128xf32>
    %14 = arith.mulf %13, %9 : vector<1x128xf32>
    %cst_6 = arith.constant dense<0.000000e+00> : vector<128xf32>
    %15 = vector.multi_reduction <add>, %12, %cst_6 [0] : vector<24x128xf32> to vector<128xf32>
    %16 = vector.shape_cast %15 : vector<128xf32> to vector<1x128xf32>
    %17 = arith.addf %14, %16 : vector<1x128xf32>
    %c0_7 = arith.constant 0 : index
    %c0_8 = arith.constant 0 : index
    %18 = vector.load %arg4[%c0_7, %c0_8] : memref<1x128xf32, #tpu.memory_space<vmem>>, vector<1x128xf32>
    tpu.vector_store %arg4[%c0_7, %c0_8], %17 {strides = array<i32>} : memref<1x128xf32, #tpu.memory_space<vmem>>, vector<1x128xf32>,
    %c0_9 = arith.constant 0 : index
    %c0_10 = arith.constant 0 : index
    %19 = vector.load %arg3[%c0_9, %c0_10] : memref<1x128xf32, #tpu.memory_space<vmem>>, vector<1x128xf32>
    tpu.vector_store %arg3[%c0_9, %c0_10], %7 {strides = array<i32>} : memref<1x128xf32, #tpu.memory_space<vmem>>, vector<1x128xf32>,
    %c0_i32_11 = arith.constant 0 : i32
    %20 = arith.cmpi eq, %arg0, %c0_i32_11 : i32
    %21 = arith.extui %20 : i1 to i32
    %c0_i32_12 = arith.constant 0 : i32
    %22 = arith.cmpi ne, %21, %c0_i32_12 : i32
    scf.if %22 {
      %c0_13 = arith.constant 0 : index
      %c0_14 = arith.constant 0 : index
      %23 = vector.load %arg3[%c0_13, %c0_14] : memref<1x128xf32, #tpu.memory_space<vmem>>, vector<1x128xf32>
      %c0_15 = arith.constant 0 : index
      %c0_16 = arith.constant 0 : index
      %24 = vector.load %arg4[%c0_15, %c0_16] : memref<1x128xf32, #tpu.memory_space<vmem>>, vector<1x128xf32>
      %cst_17 = arith.constant dense<0x7F800000> : vector<1xf32>
      %25 = vector.multi_reduction <minimumf>, %23, %cst_17 [1] : vector<1x128xf32> to vector<1xf32>
      %26 = vector.shape_cast %25 : vector<1xf32> to vector<1x1xf32>
      %cst_18 = arith.constant 0x7F800000 : f32
      %27 = vector.broadcast %cst_18 : f32 to vector<1x128xf32>
      %28 = arith.cmpf olt, %23, %27 : vector<1x128xf32>
      %29 = vector.broadcast %26 : vector<1x1xf32> to vector<1x128xf32>
      %30 = arith.subf %29, %23 : vector<1x128xf32>
      %31 = math.exp %30 : vector<1x128xf32>
      %32 = arith.mulf %24, %31 : vector<1x128xf32>
      %cst_19 = arith.constant 0.000000e+00 : f32
      %33 = vector.broadcast %cst_19 : f32 to vector<1x128xf32>
      %34 = arith.select %28, %32, %33 : vector<1x128xi1>, vector<1x128xf32>
      %cst_20 = arith.constant dense<0.000000e+00> : vector<1xf32>
      %35 = vector.multi_reduction <add>, %34, %cst_20 [1] : vector<1x128xf32> to vector<1xf32>
      %36 = vector.shape_cast %35 : vector<1xf32> to vector<1x1xf32>
      %cst_21 = arith.constant 3.000000e+03 : f32
      %37 = vector.broadcast %cst_21 : f32 to vector<1x1xf32>
      %38 = arith.divf %36, %37 : vector<1x1xf32>
      %39 = math.log %38 : vector<1x1xf32>
      %40 = arith.subf %39, %26 : vector<1x1xf32>
      %c0_22 = arith.constant 0 : index
      %c0_23 = arith.constant 0 : index
      %41 = vector.load %arg2[%c0_22, %c0_23] : memref<1x1xf32, #tpu.memory_space<vmem>>, vector<1x1xf32>
      tpu.vector_store %arg2[%c0_22, %c0_23], %40 {strides = array<i32>} : memref<1x1xf32, #tpu.memory_space<vmem>>, vector<1x1xf32>,
    } else {
    }
    return
  }
  func.func @transform_0(%arg0: i32) -> (i32, i32) {
    %c0_i32 = arith.constant 0 : i32
    %c0_i32_0 = arith.constant 0 : i32
    return %arg0, %c0_i32 : i32, i32
  }
  func.func @transform_1(%arg0: i32) -> (i32, i32) {
    %c0_i32 = arith.constant 0 : i32
    %c0_i32_0 = arith.constant 0 : i32
    %c0_i32_1 = arith.constant 0 : i32
    return %c0_i32, %c0_i32_0 : i32, i32
  }
}

</mosaic_0001>

<llo_original>
// kernel: entropic_risk_measure.1
$region0: #{entropic_risk_measure.1}
  #allocation0 [shape = 'u32[]', space=smem, size = 0x4, offset = 0x4, fixed_abs, tag = 'smem constant byte address 0x4 - core index']
  #allocation1 [shape = 'u32[144,128]{1,0:T(1,128)}', space=vmem, size = 0x12000, scoped, tag = 'internal scratch']
  #allocation2 [shape = 'f32[1,128]{1,0:T(1,128)}', space=vmem, size = 0x200, scoped, tag = 'scratch operand']
  #allocation3 [shape = 'f32[1,128]{1,0:T(1,128)}', space=vmem, size = 0x200, scoped, tag = 'scratch operand']
  %s0 = inlined_call_operand.vmem [shape: f32[24,128], index: 0, kind: input, shape index: {}]
  %s1 = inlined_call_operand.hbm [shape: f32[1,1], index: 1, kind: output, shape index: {}]
  %s2 = sld [smem:[#allocation0]]
  $region22: #{entropic_risk_measure.1} parent=0
    _
  %s4 = ssub.s32 1, %s2
  %s5 = scalar_select 0, %s4, %s2
  $region1: #{entropic_risk_measure.1} parent=0
    #allocation4 [shape = 'u8[512]{0}', space=vmem, size = 0x400, scoped, tag = 'output window, operand 0, single buffered']
    #allocation5 [shape = 's32[1]{0}', space=sflag, size = 0x4, scoped, tag = 'scoped memory for entropic_risk_measure.1']
    %6 = vsyncpa [#allocation5], 0
    // Predicated region
    $region2: #{entropic_risk_measure.1} parent=1 // pred_check
      _
    $region3: #{entropic_risk_measure.1} parent=1 // pred_check_branch
      %8 = sbr.rel (0) target = $region5
    $region4: #{entropic_risk_measure.1} parent=1 // pred_region
      _
    $region5: #{entropic_risk_measure.1} parent=1 // pred_fallthru
      _
    %p9 = scmp.eq.s32.totalorder 0, 0
    // Predicated region
    $region6: #{entropic_risk_measure.1} parent=1 // pred_check
      %p10 = pneg %p9
    $region7: #{entropic_risk_measure.1} parent=1 // pred_check_branch
      %12 = sbr.rel (%p10) target = $region9
    $region8: #{entropic_risk_measure.1} parent=1 // pred_region
      %13 = vst [vmem:[#allocation2] sm:$0x1] inf
      %14 = vst [vmem:[#allocation3] sm:$0x1] 0.0
    $region9: #{entropic_risk_measure.1} parent=1 // pred_fallthru
      _
    %v15 = vld [vmem:[%s0] sm:$0xff]
    %v16 = vld [vmem:[%s0 + $0x8] sm:$0xff]
    %v17 = vld [vmem:[%s0 + $0x10] sm:$0xff]
    %v18 = vld [vmem:[#allocation2] sm:$0x1]
    %v19 = vmin.f32 %v15, %v16
    %v20 = vmin.f32 %v19, %v17
    %v21 = vrot.slane %v20, 4
    %v22 = vmin.f32 %v20, %v21
    %v23 = vrot.slane %v22, 2
    %v24 = vmin.f32 %v22, %v23
    %v25 = vrot.slane %v24, 1
    %v26 = vmin.f32 %v24, %v25
    %v27 = vmin.f32 %v18, %v26
    %v28 = vsub.f32 %v27, %v18
    %v29 = vmul.f32 %v28, 1.442695
    %v30 = vpow.pop %v29
    %v32 = vlaneseq
    %v33 = vshrl.u32 %v32, 7
    %v34 = vsub.s32 0, %v33
    %v35 = vrot.slane %v27, %v34
    %v37 = vsub.f32 %v35, %v15
    %v38 = vsub.f32 %v35, %v16
    %v39 = vsub.f32 %v35, %v17
    %v40 = vmul.f32 %v37, 1.442695
    %v41 = vpow.pop %v40
    %v42 = vmul.f32 %v38, 1.442695
    %v43 = vpow.pop %v42
    %v44 = vmul.f32 %v39, 1.442695
    %v45 = vpow.pop %v44
    %v46 = vld [vmem:[#allocation3] sm:$0x1]
    %v47 = vmul.f32 %v46, %v30
    %v48 = vadd.f32 %v41, %v43
    %v49 = vadd.f32 %v48, %v45
    %v50 = vrot.slane %v49, 4
    %v51 = vadd.f32 %v49, %v50
    %v52 = vrot.slane %v51, 2
    %v53 = vadd.f32 %v51, %v52
    %v54 = vrot.slane %v53, 1
    %v55 = vadd.f32 %v53, %v54
    %v56 = vadd.f32 %v47, %v55
    %57 = vst [vmem:[#allocation3] sm:$0x1] %v56
    %58 = vst [vmem:[#allocation2] sm:$0x1] %v27
    // Predicated region
    $region10: #{entropic_risk_measure.1} parent=1 // pred_check
      %p59 = pneg %p9
    $region11: #{entropic_risk_measure.1} parent=1 // pred_check_branch
      %61 = sbr.rel (%p59) target = $region13
    $region12: #{entropic_risk_measure.1} parent=1 // pred_region
      %v62 = vld [vmem:[#allocation2] sm:$0x1]
      %v63 = vld [vmem:[#allocation3] sm:$0x1]
      %vm64 = vcmask 1040384
      %v65 = vsel %vm64, %v62, inf
      %66 = vmin.xlane.f32.xlu0 %v65
      %v67 = vpop.xlane.xlu0 %66
      %vm68 = vcmp.lt.f32.partialorder %v62, inf
      %v69 = vsub.f32 %v67, %v62
      %v70 = vmul.f32 %v69, 1.442695
      %v71 = vpow.pop %v70
      %v72 = vmul.f32 %v63, %v71
      %v73 = vsel %vm68, %v72, 0.0
      %v74 = vsel %vm64, %v73, 0.0
      %75 = vadd.xlane.f32.xlu0 %v74
      %v76 = vpop.xlane.xlu0 %75
      %v77 = vrcp.pop 3000.0
      %v78 = vmul.f32 %v76, %v77
      %v79 = vlog2.pop %v78
      %v80 = vmul.f32 %v79, 0.6931472
      %v81 = vsub.f32 %v80, %v67
      %vm82 = vcmask 0
      %83 = vst.msk [vmem:[#allocation4] sm:$0x1] %vm82, %v81
    $region13: #{entropic_risk_measure.1} parent=1 // pred_fallthru
      _
    // Predicated region
    $region14: #{entropic_risk_measure.1} parent=1 // pred_check
      _
    $region15: #{entropic_risk_measure.1} parent=1 // pred_check_branch
      %85 = sbr.rel (0) target = $region17
    $region16: #{entropic_risk_measure.1} parent=1 // pred_region
      %s87 = ssub.s32 16, 16
      %88 = vsyncadd [#allocation5], %s87
      %s90 = sshll.u32 [#allocation4], 4
      %s91 = int_to_ptr.vmem [resolvable:$true] %s90
      %93 = dma.vmem_to_hbm [thread:$0]  %s91, 16, %s1, [#allocation5]
    $region17: #{entropic_risk_measure.1} parent=1 // pred_fallthru
      _
    // Predicated region
    $region18: #{entropic_risk_measure.1} parent=1 // pred_check
      _
    $region19: #{entropic_risk_measure.1} parent=1 // pred_check_branch
      %95 = sbr.rel (0) target = $region21
    $region20: #{entropic_risk_measure.1} parent=1 // pred_region
      %96 = dma.done [#allocation5], 16
    $region21: #{entropic_risk_measure.1} parent=1 // pred_fallthru
      _
    %97 = vsyncpa [#allocation5], 1

</llo_original>
